<compile_context>
chip_gen: v6e
topology: v6e:2x2x1
jax: 0.10.0
libtpu: 0.0.40
codegen_flags: <defaults>
</compile_context>

<pallas_src>
import functools

import jax
import jax.numpy as jnp
from jax.experimental import pallas as pl
from jax.experimental.pallas import tpu as pltpu


# ----------------------------------------------------------------------------
# Main (slab-resident) kernel: one (bt, C, HW) slab per grid step.
# ----------------------------------------------------------------------------
def _se_kernel(x_ref, w1_ref, w2_ref, o_ref, *, inv_hw):
    # x_ref:  (bt, C, HW)  activations, native dtype (HW may be non-128-aligned)
    # w1_ref: (Cr, C)      fc1.weight (nn.Linear layout), f32
    # w2_ref: (C, Cr)      fc2.weight (nn.Linear layout), f32
    x = x_ref[...]

    # squeeze: global average pool, accumulated in f32 (no f32 tile copy).
    s = jnp.sum(x, axis=-1, dtype=jnp.float32) * inv_hw          # (bt, C)

    # excitation: fc1 -> relu -> fc2 -> sigmoid. Transposed contraction keeps
    # the weights in nn.Linear layout (MXU handles it natively).
    y1 = jax.lax.dot_general(s, w1_ref[...], (((1,), (1,)), ((), ())),
                             preferred_element_type=jnp.float32)  # (bt, Cr)
    y1 = jnp.maximum(y1, 0.0)
    y2 = jax.lax.dot_general(y1, w2_ref[...], (((1,), (1,)), ((), ())),
                             preferred_element_type=jnp.float32)  # (bt, C)
    gate = jax.nn.sigmoid(y2).astype(o_ref.dtype)                 # (bt, C)

    # scale: broadcast per-channel gate over the spatial (lane) axis.
    o_ref[...] = x * gate[:, :, None]


# ----------------------------------------------------------------------------
# Chunked fallback (slab too big for VMEM): stream lane-aligned HW chunks.
# ----------------------------------------------------------------------------
def _pool_excite_kernel(x_ref, w1_ref, w2_ref, gate_ref, acc_ref,
                        *, inv_hw, hw, chunk):
    # grid = (B, n_chunks); accumulate per-channel sums across chunks, emit
    # the per-batch gate on the final chunk. Edge-chunk OOB lanes are masked.
    j = pl.program_id(1)

    @pl.when(j == 0)
    def _():
        acc_ref[...] = jnp.zeros_like(acc_ref)

    x = x_ref[...]                                                # (1, C, chunk)
    lane = jax.lax.broadcasted_iota(jnp.int32, x.shape, 2) + j * chunk
    xm = jnp.where(lane < hw, x.astype(jnp.float32), 0.0)
    acc_ref[...] += jnp.sum(xm, axis=-1)                          # (1, C)

    @pl.when(j == pl.num_programs(1) - 1)
    def _():
        s = acc_ref[...] * inv_hw                                 # (1, C)
        y1 = jax.lax.dot_general(s, w1_ref[...], (((1,), (1,)), ((), ())),
                                 preferred_element_type=jnp.float32)
        y1 = jnp.maximum(y1, 0.0)
        y2 = jax.lax.dot_general(y1, w2_ref[...], (((1,), (1,)), ((), ())),
                                 preferred_element_type=jnp.float32)
        gate_ref[...] = jax.nn.sigmoid(y2)[:, :, None]            # (1, C, 1)


def _scale_kernel(x_ref, gate_ref, o_ref):
    # x_ref: (1, C, chunk); gate_ref: (1, C, 1). Edge-chunk OOB stores are
    # discarded by Pallas (partial last block).
    o_ref[...] = x_ref[...] * gate_ref[...].astype(o_ref.dtype)


# ----------------------------------------------------------------------------
# Wrapper
# ----------------------------------------------------------------------------
def _vmem_capacity_bytes():
    # Generation gate: 128 MiB physical on v5e/v6e, 64 MiB per TC on v7x.
    try:
        return int(pltpu.get_tpu_info().vmem_capacity_bytes)
    except Exception:
        return 64 << 20  # conservative default (v7x per-TC size)


def _pick_bt(B, per_b, block_budget):
    """Largest batch-tile that fits VMEM while keeping the DMA pipeline full."""
    divs = [d for d in range(1, B + 1) if B % d == 0]
    fits = [d for d in divs if d * per_b <= block_budget]
    if not fits:
        return None  # single batch slab does not fit -> chunked fallback
    target_steps = min(B, 4)  # >=3-4 steps keeps both DMA directions busy

    def key(d):
        g = B // d
        return (d * per_b <= (8 << 20),   # soft cap ~8 MiB per block
                g >= target_steps,        # enough pipeline steps
                g % 2 == 0,               # even grid: balanced v7x megacore
                d)                        # then biggest block

    return max(fits, key=key)


def _se_chunked(x_flat, w1, w2, *, budget, limit_cap, itemsize):
    B, C, HW = x_flat.shape
    Cr = w1.shape[0]
    weight_bytes = (w1.size + w2.size) * 4

    # lane-aligned spatial chunk sized so in+out double-buffers fit the budget
    chunk = (budget // (4 * C * itemsize)) // 128 * 128
    chunk = max(128, min(chunk, pl.cdiv(HW, 128) * 128))
    n_chunks = pl.cdiv(HW, chunk)
    chunk_bytes = C * chunk * itemsize

    pool_limit = int(min(limit_cap,
                         max(16 << 20, 2 * chunk_bytes + 2 * weight_bytes + (2 << 20))))
    scale_limit = int(min(limit_cap,
                          max(16 << 20, 4 * chunk_bytes + (2 << 20))))

    # pass 1: masked pool + excite -> per-batch, per-channel gate (B, C, 1) f32
    gate = pl.pallas_call(
        functools.partial(_pool_excite_kernel, inv_hw=1.0 / HW, hw=HW, chunk=chunk),
        out_shape=jax.ShapeDtypeStruct((B, C, 1), jnp.float32),
        grid_spec=pltpu.PrefetchScalarGridSpec(
            num_scalar_prefetch=0,
            grid=(B, n_chunks),
            in_specs=[
                pl.BlockSpec((1, C, chunk), lambda b, j: (b, 0, j)),
                pl.BlockSpec((Cr, C), lambda b, j: (0, 0)),
                pl.BlockSpec((C, Cr), lambda b, j: (0, 0)),
            ],
            out_specs=pl.BlockSpec((1, C, 1), lambda b, j: (b, 0, 0)),
            scratch_shapes=[pltpu.VMEM((1, C), jnp.float32)],
        ),
        compiler_params=pltpu.CompilerParams(
            dimension_semantics=("parallel", "arbitrary"),
            vmem_limit_bytes=pool_limit),
        cost_estimate=pl.CostEstimate(
            flops=B * C * HW + 4 * B * C * Cr,
            transcendentals=B * C,
            bytes_accessed=B * C * HW * itemsize + weight_bytes),
    )(x_flat, w1, w2)

    # pass 2: re-stream chunks and apply the gate
    out_flat = pl.pallas_call(
        _scale_kernel,
        out_shape=jax.ShapeDtypeStruct((B, C, HW), x_flat.dtype),
        grid_spec=pltpu.PrefetchScalarGridSpec(
            num_scalar_prefetch=0,
            grid=(B, n_chunks),
            in_specs=[
                pl.BlockSpec((1, C, chunk), lambda b, j: (b, 0, j)),
                pl.BlockSpec((1, C, 1), lambda b, j: (b, 0, 0)),
            ],
            out_specs=pl.BlockSpec((1, C, chunk), lambda b, j: (b, 0, j)),
        ),
        compiler_params=pltpu.CompilerParams(
            dimension_semantics=("parallel", "parallel"),
            vmem_limit_bytes=scale_limit),
        cost_estimate=pl.CostEstimate(
            flops=B * C * HW,
            transcendentals=0,
            bytes_accessed=2 * B * C * HW * itemsize),
    )(x_flat, gate)
    return out_flat


def squeeze_excitation(x, w1, w2, *, block_budget_bytes=None):
    """x: (B, C, H, W) NCHW. w1: (C//r, C), w2: (C, C//r) (nn.Linear layout)."""
    B, C, H, W = x.shape
    HW = H * W
    Cr = w1.shape[0]
    itemsize = jnp.dtype(x.dtype).itemsize

    x_flat = x.reshape(B, C, HW)          # no padding, no trailing slice
    w1 = jnp.asarray(w1, jnp.float32)     # cast once in the wrapper
    w2 = jnp.asarray(w2, jnp.float32)
    weight_bytes = (w1.size + w2.size) * 4

    vmem_cap = _vmem_capacity_bytes()
    # leave >=16 MiB headroom for compiler scratch/semaphores; never ask for
    # the whole per-TC VMEM (v7x) and don't go wild on v5e/v6e either.
    limit_cap = max(24 << 20, min(vmem_cap - (16 << 20), 96 << 20))
    block_budget = max(1 << 20, (limit_cap - 2 * weight_bytes - (2 << 20)) // 4)
    if block_budget_bytes is not None:
        block_budget = block_budget_bytes

    per_b = C * HW * itemsize
    bt = _pick_bt(B, per_b, block_budget)

    if bt is None:
        # single (1, C, HW) slab exceeds the VMEM block budget -> stream chunks
        out_flat = _se_chunked(x_flat, w1, w2, budget=block_budget,
                               limit_cap=limit_cap, itemsize=itemsize)
        return out_flat.reshape(B, C, H, W)

    grid_b = B // bt
    block_bytes = bt * per_b
    vmem_limit = int(min(limit_cap,
                         max(16 << 20, 4 * block_bytes + 2 * weight_bytes + (2 << 20))))

    cost = pl.CostEstimate(
        flops=2 * B * C * HW + 4 * B * C * Cr,
        transcendentals=B * C,
        bytes_accessed=2 * B * C * HW * itemsize + weight_bytes,
    )

    # Possible further win on v7x: pipeline_mode=pl.Buffered(3) on the slab
    # BlockSpecs once grid_b >= 4 and VMEM allows (needs a sweep to confirm).
    out_flat = pl.pallas_call(
        functools.partial(_se_kernel, inv_hw=1.0 / HW),
        out_shape=jax.ShapeDtypeStruct((B, C, HW), x.dtype),
        grid_spec=pltpu.PrefetchScalarGridSpec(
            num_scalar_prefetch=0,
            grid=(grid_b,),
            in_specs=[
                pl.BlockSpec((bt, C, HW), lambda b: (b, 0, 0)),
                pl.BlockSpec((Cr, C), lambda b: (0, 0)),    # fc1.weight
                pl.BlockSpec((C, Cr), lambda b: (0, 0)),    # fc2.weight
            ],
            out_specs=pl.BlockSpec((bt, C, HW), lambda b: (b, 0, 0)),
        ),
        compiler_params=pltpu.CompilerParams(
            dimension_semantics=("parallel",),
            vmem_limit_bytes=vmem_limit),
        cost_estimate=cost,
    )(x_flat, w1, w2)

    return out_flat.reshape(B, C, H, W)


# ----------------------------------------------------------------------------
# Reference + tests
# ----------------------------------------------------------------------------
def _reference(x, w1, w2):
    B, C, H, W = x.shape
    y = x.reshape(B, C, -1).mean(axis=2)          # (B, C)
    y = y @ w1.T                                  # (B, C//r)
    y = jnp.maximum(y, 0.0)
    y = y @ w2.T                                  # (B, C)
    y = jax.nn.sigmoid(y).reshape(B, C, 1, 1)
    return x * y


def _run_case(key, B, C, H, W, reduction, block_budget_bytes=None):
    Cr = max(1, C // reduction)
    kx, k1, k2 = jax.random.split(key, 3)
    x = jax.random.normal(kx, (B, C, H, W), dtype=jnp.float32)
    w1 = jax.random.normal(k1, (Cr, C), dtype=jnp.float32) * 0.1
    w2 = jax.random.normal(k2, (C, Cr), dtype=jnp.float32) * 0.1

    out = squeeze_excitation(x, w1, w2, block_budget_bytes=block_budget_bytes)
    out = jax.block_until_ready(out)

    ref = _reference(x, w1, w2)
    assert out.shape == (B, C, H, W)
    assert jnp.allclose(out, ref, atol=1e-5, rtol=1e-5)


if __name__ == "__main__":
    key = jax.random.PRNGKey(0)
    k_a, k_b, k_c = jax.random.split(key, 3)
    # in_channels=64, reduction=16 -> hidden=4; HW=256 (lane-dense, slab path)
    _run_case(k_a, B=2, C=64, H=16, W=16, reduction=16)
    # classic late-stage SE shape: 7x7 spatial (HW=49, unpadded masked lanes)
    _run_case(k_b, B=2, C=64, H=7, W=7, reduction=16)
    # force the chunked fallback (ragged last chunk: HW=300, chunk=128)
    _run_case(k_c, B=2, C=64, H=20, W=15, reduction=16,
              block_budget_bytes=32 * 1024)
    print("KERNEL_OK")
</pallas_src>

<mosaic_0001>
module attributes {stable_mosaic.version = 11 : i64} {
  func.func @_se_kernel(%arg0: i32, %arg1: memref<1x64x256xf32, #tpu.memory_space<vmem>>, %arg2: memref<4x64xf32, #tpu.memory_space<vmem>>, %arg3: memref<64x4xf32, #tpu.memory_space<vmem>>, %arg4: memref<1x64x256xf32, #tpu.memory_space<vmem>>) attributes {dimension_semantics = [#tpu.dimension_semantics<parallel>], iteration_bounds = array<i64: 2>, scalar_prefetch = 0 : i64, scratch_operands = 0 : i64, tpu.core_type = #tpu.core_type<tc>, window_params = [{transform_indices = @transform_0, window_bounds = array<i64: 1, 64, 256>}, {pipeline_mode = #tpu.pipeline_mode<synchronous>, transform_indices = @transform_1, window_bounds = array<i64: 4, 64>}, {pipeline_mode = #tpu.pipeline_mode<synchronous>, transform_indices = @transform_2, window_bounds = array<i64: 64, 4>}, {transform_indices = @transform_3, window_bounds = array<i64: 1, 64, 256>}]} {
    %c0 = arith.constant 0 : index
    %c0_0 = arith.constant 0 : index
    %c0_1 = arith.constant 0 : index
    %0 = vector.load %arg1[%c0, %c0_0, %c0_1] : memref<1x64x256xf32, #tpu.memory_space<vmem>>, vector<1x64x256xf32>
    %cst = arith.constant dense<0.000000e+00> : vector<1x64xf32>
    %1 = vector.multi_reduction <add>, %0, %cst [2] : vector<1x64x256xf32> to vector<1x64xf32>
    %cst_2 = arith.constant 3.906250e-03 : f32
    %2 = vector.broadcast %cst_2 : f32 to vector<1x64xf32>
    %3 = arith.mulf %1, %2 : vector<1x64xf32>
    %c0_3 = arith.constant 0 : index
    %c0_4 = arith.constant 0 : index
    %4 = vector.load %arg2[%c0_3, %c0_4] : memref<4x64xf32, #tpu.memory_space<vmem>>, vector<4x64xf32>
    %cst_5 = arith.constant dense<0.000000e+00> : vector<1x4xf32>
    %5 = tpu.matmul %3, %4, %cst_5 {dimension_numbers = #tpu.dot_dimension_numbers<[1], [1], [0], [0], [0, 0, 1, 0], [], []>} : vector<1x64xf32>, vector<4x64xf32>, vector<1x4xf32> -> vector<1x4xf32>
    %cst_6 = arith.constant 0.000000e+00 : f32
    %6 = vector.broadcast %cst_6 : f32 to vector<1x4xf32>
    %7 = arith.maximumf %5, %6 : vector<1x4xf32>
    %c0_7 = arith.constant 0 : index
    %c0_8 = arith.constant 0 : index
    %8 = vector.load %arg3[%c0_7, %c0_8] : memref<64x4xf32, #tpu.memory_space<vmem>>, vector<64x4xf32>
    %cst_9 = arith.constant dense<0.000000e+00> : vector<1x64xf32>
    %9 = tpu.matmul %7, %8, %cst_9 {dimension_numbers = #tpu.dot_dimension_numbers<[1], [1], [0], [0], [0, 0, 1, 0], [], []>} : vector<1x4xf32>, vector<64x4xf32>, vector<1x64xf32> -> vector<1x64xf32>
    %10 = arith.negf %9 : vector<1x64xf32>
    %11 = math.exp %10 : vector<1x64xf32>
    %cst_10 = arith.constant 1.000000e+00 : f32
    %12 = vector.broadcast %cst_10 : f32 to vector<1x64xf32>
    %13 = arith.addf %12, %11 : vector<1x64xf32>
    %14 = arith.divf %12, %13 : vector<1x64xf32>
    %15 = vector.shape_cast %14 : vector<1x64xf32> to vector<1x64x1xf32>
    %16 = vector.broadcast %15 : vector<1x64x1xf32> to vector<1x64x256xf32>
    %17 = arith.mulf %0, %16 : vector<1x64x256xf32>
    %c0_11 = arith.constant 0 : index
    %c0_12 = arith.constant 0 : index
    %c0_13 = arith.constant 0 : index
    %18 = vector.load %arg4[%c0_11, %c0_12, %c0_13] : memref<1x64x256xf32, #tpu.memory_space<vmem>>, vector<1x64x256xf32>
    tpu.vector_store %arg4[%c0_11, %c0_12, %c0_13], %17 {strides = array<i32>} : memref<1x64x256xf32, #tpu.memory_space<vmem>>, vector<1x64x256xf32>,
    return
  }
  func.func @transform_0(%arg0: i32) -> (i32, i32, i32) {
    %c0_i32 = arith.constant 0 : i32
    %c0_i32_0 = arith.constant 0 : i32
    %c0_i32_1 = arith.constant 0 : i32
    return %arg0, %c0_i32, %c0_i32_0 : i32, i32, i32
  }
  func.func @transform_1(%arg0: i32) -> (i32, i32) {
    %c0_i32 = arith.constant 0 : i32
    %c0_i32_0 = arith.constant 0 : i32
    %c0_i32_1 = arith.constant 0 : i32
    return %c0_i32, %c0_i32_0 : i32, i32
  }
  func.func @transform_2(%arg0: i32) -> (i32, i32) {
    %c0_i32 = arith.constant 0 : i32
    %c0_i32_0 = arith.constant 0 : i32
    %c0_i32_1 = arith.constant 0 : i32
    return %c0_i32, %c0_i32_0 : i32, i32
  }
  func.func @transform_3(%arg0: i32) -> (i32, i32, i32) {
    %c0_i32 = arith.constant 0 : i32
    %c0_i32_0 = arith.constant 0 : i32
    %c0_i32_1 = arith.constant 0 : i32
    return %arg0, %c0_i32, %c0_i32_0 : i32, i32, i32
  }
}

</mosaic_0001>

<llo_original>
// kernel: tpu_custom_call.1
$region0: #{tpu_custom_call.1}
  #allocation0 [shape = 'u32[]', space=smem, size = 0x4, offset = 0x4, fixed_abs, tag = 'smem constant byte address 0x4 - core index']
  #allocation1 [shape = 'u32[144,128]{1,0:T(1,128)}', space=vmem, size = 0x12000, scoped, tag = 'internal scratch']
  %s0 = inlined_call_operand.hbm [shape: f32[2,64,256], index: 0, kind: input, shape index: {}]
  %s1 = inlined_call_operand.vmem [shape: f32[4,64], index: 1, kind: input, shape index: {}]
  %s2 = inlined_call_operand.vmem [shape: f32[64,4], index: 2, kind: input, shape index: {}]
  %s3 = inlined_call_operand.hbm [shape: f32[2,64,256], index: 3, kind: output, shape index: {}]
  %s4 = sld [smem:[#allocation0]]
  $region49: #{tpu_custom_call.1} parent=0
    _
  %s6 = ssub.s32 1, %s4
  %s7 = scalar_select 0, %s6, %s4
  $region1: #{tpu_custom_call.1} parent=0
    #allocation2 [shape = 'u8[131072]{0}', space=vmem, size = 0x20000, scoped, tag = 'input window, operand 0']
    #allocation3 [shape = 's32[2]{0}', space=sflag, size = 0x8, scoped, tag = 'scoped memory for tpu_custom_call.1']
    #allocation4 [shape = 's32[2]{0}', space=sflag, size = 0x8, scoped, tag = 'scoped memory for tpu_custom_call.1']
    #allocation5 [shape = 'u8[131072]{0}', space=vmem, size = 0x20000, scoped, tag = 'output window, operand 0']
    %8 = vsyncpa [#allocation3], 0
    %s9 = scalar_lea.sflag [#allocation3], 1
    %10 = vsyncpa %s9, 0
    %11 = vsyncpa [#allocation4], 0
    %s12 = scalar_lea.sflag [#allocation4], 1
    %13 = vsyncpa %s12, 0
    loop: start=0, step=1, limit=4
    $region2: #{tpu_custom_call.1} parent=1 // loop_pre_header
      _
    $region3: #{tpu_custom_call.1} parent=1 // loop_header
      %s15 = sphi 0, %s19
      %p16 = scmp.ge.s32.totalorder %s15, 4
      %s25 = sphi 0, %s27
      %s28 = sphi 0, %s25
      %s29 = sphi 0, %s28
      %s45 = sphi 0, %s29
      %s49 = sphi 0, %s49
      %s51 = sphi 0, %s49
      %s52 = sphi 0, %s51
      %s66 = sphi 0, %s52
      %s70 = sphi 0, %s70
      %s72 = sphi 0, %s70
      %s73 = sphi 0, %s72
      %s87 = sphi 0, %s73
      %s93 = sphi 0, %s95
      %s96 = sphi 0, %s93
      %s97 = sphi 0, %s96
      %s113 = sphi 0, %s97
    $region4: #{tpu_custom_call.1} parent=1 // loop_header_branch
      %18 = sbr.rel (%p16) target = $region8
    $region5: #{tpu_custom_call.1} parent=1 // loop_body
      %s20 = ssub.s32 %s15, 1
      %s21 = ssub.s32 %s15, 2
      %s22 = sadd.s32 %s15, 1
      %s23 = ssub.s32 %s15, %s22
      %p24 = scmp.eq.s32.totalorder %s23, 0
      %s26 = sadd.s32 %s25, 1
      %s27 = scalar_select %p24, %s25, %s26
      %p30 = pneg %p24
      %p31 = scmp.eq.s32.totalorder %s15, 1
      %p32 = por %p30, %p31
      %p33 = scmp.ne.s32.totalorder %s25, %s28
      %p34 = scmp.eq.s32.totalorder %s15, 0
      %p35 = por %p33, %p34
      %p36 = scmp.ne.s32.totalorder %s25, %s28
      %p37 = scmp.eq.s32.totalorder %s20, 1
      %p38 = por %p36, %p37
      %p39 = scmp.ne.s32.totalorder %s28, %s29
      %p40 = scmp.eq.s32.totalorder %s20, 0
      %p41 = por %p39, %p40
      %p42 = scmp.ne.s32.totalorder %s28, %s29
      %p43 = scmp.eq.s32.totalorder %s21, 1
      %p44 = por %p42, %p43
      %p46 = scmp.ne.s32.totalorder %s29, %s45
      %p47 = scmp.eq.s32.totalorder %s21, 0
      %p48 = por %p46, %p47
      %s50 = sadd.s32 %s49, 1
      %p53 = scmp.eq.s32.totalorder %s15, 1
      %p54 = scmp.ne.s32.totalorder %s49, %s51
      %p55 = scmp.eq.s32.totalorder %s15, 0
      %p56 = por %p54, %p55
      %p57 = scmp.ne.s32.totalorder %s49, %s51
      %p58 = scmp.eq.s32.totalorder %s20, 1
      %p59 = por %p57, %p58
      %p60 = scmp.ne.s32.totalorder %s51, %s52
      %p61 = scmp.eq.s32.totalorder %s20, 0
      %p62 = por %p60, %p61
      %p63 = scmp.ne.s32.totalorder %s51, %s52
      %p64 = scmp.eq.s32.totalorder %s21, 1
      %p65 = por %p63, %p64
      %p67 = scmp.ne.s32.totalorder %s52, %s66
      %p68 = scmp.eq.s32.totalorder %s21, 0
      %p69 = por %p67, %p68
      %s71 = sadd.s32 %s70, 1
      %p74 = scmp.eq.s32.totalorder %s15, 1
      %p75 = scmp.ne.s32.totalorder %s70, %s72
      %p76 = scmp.eq.s32.totalorder %s15, 0
      %p77 = por %p75, %p76
      %p78 = scmp.ne.s32.totalorder %s70, %s72
      %p79 = scmp.eq.s32.totalorder %s20, 1
      %p80 = por %p78, %p79
      %p81 = scmp.ne.s32.totalorder %s72, %s73
      %p82 = scmp.eq.s32.totalorder %s20, 0
      %p83 = por %p81, %p82
      %p84 = scmp.ne.s32.totalorder %s72, %s73
      %p85 = scmp.eq.s32.totalorder %s21, 1
      %p86 = por %p84, %p85
      %p88 = scmp.ne.s32.totalorder %s73, %s87
      %p89 = scmp.eq.s32.totalorder %s21, 0
      %p90 = por %p88, %p89
      %s91 = ssub.s32 %s15, %s22
      %p92 = scmp.eq.s32.totalorder %s91, 0
      %s94 = sadd.s32 %s93, 1
      %s95 = scalar_select %p92, %s93, %s94
      %p98 = pneg %p92
      %p99 = scmp.eq.s32.totalorder %s15, 1
      %p100 = por %p98, %p99
      %p101 = scmp.ne.s32.totalorder %s93, %s96
      %p102 = scmp.eq.s32.totalorder %s15, 0
      %p103 = por %p101, %p102
      %p104 = scmp.ne.s32.totalorder %s93, %s96
      %p105 = scmp.eq.s32.totalorder %s20, 1
      %p106 = por %p104, %p105
      %p107 = scmp.ne.s32.totalorder %s96, %s97
      %p108 = scmp.eq.s32.totalorder %s20, 0
      %p109 = por %p107, %p108
      %p110 = scmp.ne.s32.totalorder %s96, %s97
      %p111 = scmp.eq.s32.totalorder %s21, 1
      %p112 = por %p110, %p111
      %p114 = scmp.ne.s32.totalorder %s97, %s113
      %p115 = scmp.eq.s32.totalorder %s21, 0
      %p116 = por %p114, %p115
      %p117 = scmp.le.s32.totalorder 1, %s15
      %p118 = scmp.lt.s32.totalorder %s15, 3
      %p119 = pnand %p117, %p118
      %p120 = pneg %p119
      // Predicated region
      $region9: #{tpu_custom_call.1} parent=5 // pred_check
        _
      $region10: #{tpu_custom_call.1} parent=5 // pred_check_branch
        %122 = sbr.rel (%p119) target = $region12
      $region11: #{tpu_custom_call.1} parent=5 // pred_region
        %s123 = ssub.s32 %s15, 1
        // Predicated region
        $region13: #{tpu_custom_call.1} parent=11 // pred_check
          %p124 = pneg %p62
        $region14: #{tpu_custom_call.1} parent=11 // pred_check_branch
          %126 = sbr.rel (%p124) target = $region16
        $region15: #{tpu_custom_call.1} parent=11 // pred_region
          _
        $region16: #{tpu_custom_call.1} parent=11 // pred_fallthru
          _
        // Predicated region
        $region17: #{tpu_custom_call.1} parent=11 // pred_check
          %p127 = pneg %p83
        $region18: #{tpu_custom_call.1} parent=11 // pred_check_branch
          %129 = sbr.rel (%p127) target = $region20
        $region19: #{tpu_custom_call.1} parent=11 // pred_region
          _
        $region20: #{tpu_custom_call.1} parent=11 // pred_fallthru
          _
      $region12: #{tpu_custom_call.1} parent=5 // pred_fallthru
        _
      %p130 = scmp.lt.s32.totalorder %s15, 2
      // Predicated region
      $region21: #{tpu_custom_call.1} parent=5 // pred_check
        %p131 = pneg %p130
      $region22: #{tpu_custom_call.1} parent=5 // pred_check_branch
        %133 = sbr.rel (%p131) target = $region24
      $region23: #{tpu_custom_call.1} parent=5 // pred_region
        // Predicated region
        $region25: #{tpu_custom_call.1} parent=23 // pred_check
          %p134 = pneg %p35
        $region26: #{tpu_custom_call.1} parent=23 // pred_check_branch
          %136 = sbr.rel (%p134) target = $region28
        $region27: #{tpu_custom_call.1} parent=23 // pred_region
          %s137 = sand.u32 %s25, 1
          %s138 = scalar_lea.sflag [#allocation3], %s137
          %s139 = sand.u32 %s25, 1
          %s140 = smul.addr %s139, 128
          %s141 = scalar_lea.vmem [#allocation2], %s140
          %s143 = ssub.s32 2048, 2048
          %144 = vsyncadd %s138, %s143
          %s145 = smul.addr %s15, 16
          %s146 = smul.addr %s145, 128
          %s147 = scalar_lea.hbm %s0, %s146
          %s148 = sshll.u32 %s141, 4
          %s149 = int_to_ptr.vmem [resolvable:$true] %s148
          %154 = dma.hbm_to_vmem [thread:$0]  %s147, 2048, %s149, %s138, 256, 256, 16
        $region28: #{tpu_custom_call.1} parent=23 // pred_fallthru
          _
      $region24: #{tpu_custom_call.1} parent=5 // pred_fallthru
        _
      %p155 = scmp.le.s32.totalorder 1, %s15
      %p156 = scmp.lt.s32.totalorder %s15, 3
      %p157 = pnand %p155, %p156
      %p158 = pneg %p157
      // Predicated region
      $region29: #{tpu_custom_call.1} parent=5 // pred_check
        _
      $region30: #{tpu_custom_call.1} parent=5 // pred_check_branch
        %160 = sbr.rel (%p157) target = $region32
      $region31: #{tpu_custom_call.1} parent=5 // pred_region
        %s161 = ssub.s32 %s15, 1
        %s162 = sand.u32 %s28, 1
        %s163 = scalar_lea.sflag [#allocation3], %s162
        %s164 = sand.u32 %s28, 1
        %s165 = smul.addr %s164, 128
        %s166 = scalar_lea.vmem [#allocation2], %s165
        // Predicated region
        $region33: #{tpu_custom_call.1} parent=31 // pred_check
          %p167 = pneg %p41
        $region34: #{tpu_custom_call.1} parent=31 // pred_check_branch
          %169 = sbr.rel (%p167) target = $region36
        $region35: #{tpu_custom_call.1} parent=31 // pred_region
          %170 = dma.done %s163, 2048
        $region36: #{tpu_custom_call.1} parent=31 // pred_fallthru
          _
        %s171 = sand.u32 %s28, 1
        %s172 = scalar_lea.sflag [#allocation3], %s171
        %s173 = sand.u32 %s28, 1
        %s174 = smul.addr %s173, 128
        %s175 = scalar_lea.vmem [#allocation2], %s174
        %p176 = pneg %p41
        %p177 = pneg %p38
        %p178 = pneg %p62
        %p179 = pneg %p59
        %p180 = pneg %p83
        %p181 = pneg %p80
        %p182 = pneg %p109
        %p183 = pneg %p106
        %s184 = sand.u32 %s96, 1
        %s185 = scalar_lea.sflag [#allocation4], %s184
        %s186 = sand.u32 %s96, 1
        %s187 = smul.addr %s186, 128
        %s188 = scalar_lea.vmem [#allocation5], %s187
        %v189 = vld [vmem:[%s166] sm:$0xff]
        %v190 = vld [vmem:[%s166 + $0x8] sm:$0xff]
        %v191 = vld [vmem:[%s166 + $0x10] sm:$0xff]
        %v192 = vld [vmem:[%s166 + $0x18] sm:$0xff]
        %v193 = vld [vmem:[%s166 + $0x20] sm:$0xff]
        %v194 = vld [vmem:[%s166 + $0x28] sm:$0xff]
        %v195 = vld [vmem:[%s166 + $0x30] sm:$0xff]
        %v196 = vld [vmem:[%s166 + $0x38] sm:$0xff]
        %v197 = vld [vmem:[%s166 + $0x40] sm:$0xff]
        %v198 = vld [vmem:[%s166 + $0x48] sm:$0xff]
        %v199 = vld [vmem:[%s166 + $0x50] sm:$0xff]
        %v200 = vld [vmem:[%s166 + $0x58] sm:$0xff]
        %v201 = vld [vmem:[%s166 + $0x60] sm:$0xff]
        %v202 = vld [vmem:[%s166 + $0x68] sm:$0xff]
        %v203 = vld [vmem:[%s166 + $0x70] sm:$0xff]
        %v204 = vld [vmem:[%s166 + $0x78] sm:$0xff]
        %v205 = vadd.f32 %v189, %v190
        %206 = vadd.xlane.f32.xlu0 %v205
        %v207 = vpop.xlane.xlu0 %206
        %v208 = vadd.f32 %v191, %v192
        %209 = vadd.xlane.f32.xlu0 %v208
        %v210 = vpop.xlane.xlu0 %209
        %v211 = vadd.f32 %v193, %v194
        %212 = vadd.xlane.f32.xlu0 %v211
        %v213 = vpop.xlane.xlu0 %212
        %v214 = vadd.f32 %v195, %v196
        %215 = vadd.xlane.f32.xlu0 %v214
        %v216 = vpop.xlane.xlu0 %215
        %v217 = vadd.f32 %v197, %v198
        %218 = vadd.xlane.f32.xlu0 %v217
        %v219 = vpop.xlane.xlu0 %218
        %v220 = vadd.f32 %v199, %v200
        %221 = vadd.xlane.f32.xlu0 %v220
        %v222 = vpop.xlane.xlu0 %221
        %v223 = vadd.f32 %v201, %v202
        %224 = vadd.xlane.f32.xlu0 %v223
        %v225 = vpop.xlane.xlu0 %224
        %v226 = vadd.f32 %v203, %v204
        %227 = vadd.xlane.f32.xlu0 %v226
        %v228 = vpop.xlane.xlu0 %227
        %v229 = vmul.f32 %v207, 0.00390625
        %v230 = vmul.f32 %v210, 0.00390625
        %v231 = vmul.f32 %v213, 0.00390625
        %v232 = vmul.f32 %v216, 0.00390625
        %v233 = vmul.f32 %v219, 0.00390625
        %v234 = vmul.f32 %v222, 0.00390625
        %v235 = vmul.f32 %v225, 0.00390625
        %v236 = vmul.f32 %v228, 0.00390625
        %v237 = vld [vmem:[%s1] sm:$0xf]
        %v246 = vlaneseq
        %v247 = vand.u32 %v246, 127
        %v248 = vlaneseq
        %v249 = vshrl.u32 %v248, 7
        %v250 = vsub.s32 %v247, %v249
        %v251 = vrot.slane %v229, %v250
        %v252 = vadd.s32 %v247, 4294967288
        %v253 = vlaneseq
        %v254 = vshrl.u32 %v253, 7
        %v255 = vsub.s32 %v252, %v254
        %v256 = vrot.slane %v230, %v255
        %vm257 = vcmask 130112
        %v258 = vsel %vm257, %v256, %v251
        %v259 = vadd.s32 %v247, 4294967280
        %v260 = vlaneseq
        %v261 = vshrl.u32 %v260, 7
        %v262 = vsub.s32 %v259, %v261
        %v263 = vrot.slane %v231, %v262
        %vm264 = vcmask 195712
        %v265 = vsel %vm264, %v263, %v258
        %v266 = vadd.s32 %v247, 4294967272
        %v267 = vlaneseq
        %v268 = vshrl.u32 %v267, 7
        %v269 = vsub.s32 %v266, %v268
        %v270 = vrot.slane %v232, %v269
        %vm271 = vcmask 261312
        %v272 = vsel %vm271, %v270, %v265
        %v273 = vadd.s32 %v247, 4294967264
        %v274 = vlaneseq
        %v275 = vshrl.u32 %v274, 7
        %v276 = vsub.s32 %v273, %v275
        %v277 = vrot.slane %v233, %v276
        %vm278 = vcmask 326912
        %v279 = vsel %vm278, %v277, %v272
        %v280 = vadd.s32 %v247, 4294967256
        %v281 = vlaneseq
        %v282 = vshrl.u32 %v281, 7
        %v283 = vsub.s32 %v280, %v282
        %v284 = vrot.slane %v234, %v283
        %vm285 = vcmask 392512
        %v286 = vsel %vm285, %v284, %v279
        %v287 = vadd.s32 %v247, 4294967248
        %v288 = vlaneseq
        %v289 = vshrl.u32 %v288, 7
        %v290 = vsub.s32 %v287, %v289
        %v291 = vrot.slane %v235, %v290
        %vm292 = vcmask 458112
        %v293 = vsel %vm292, %v291, %v286
        %v294 = vadd.s32 %v247, 4294967240
        %v295 = vlaneseq
        %v296 = vshrl.u32 %v295, 7
        %v297 = vsub.s32 %v294, %v296
        %v298 = vrot.slane %v236, %v297
        %vm299 = vcmask 523712
        %v300 = vsel %vm299, %v298, %v293
        %vm301 = vcmask 523264
        %v302 = vsel %vm301, %v300, 0
        %v305 = vsel %vm301, %v237, 0
        %307 = vmatprep.subr.mxu0 0.0
        %308 = vmatpush1.xpose.msra.mxu0 0.0
        %309 = vmatprep.subr.mxu0 0.0
        %310 = vmatpush1.xpose.msra.mxu0 0.0
        %311 = vmatprep.subr.mxu0 0.0
        %312 = vmatpush1.xpose.msra.mxu0 0.0
        %313 = vmatprep.subr.mxu0 0.0
        %314 = vmatpush1.xpose.msra.mxu0 0.0
        %315 = vmatprep.subr.mxu0 0.0
        %316 = vmatpush1.xpose.msra.mxu0 0.0
        %317 = vmatprep.subr.mxu0 0.0
        %318 = vmatpush1.xpose.msra.mxu0 0.0
        %319 = vmatprep.subr.mxu0 0.0
        %320 = vmatpush1.xpose.msra.mxu0 0.0
        %321 = vmatprep.subr.mxu0 0.0
        %322 = vmatpush1.xpose.msra.mxu0 0.0
        %323 = vmatprep.subr.mxu0 0.0
        %324 = vmatpush1.xpose.msra.mxu0 0.0
        %325 = vmatprep.subr.mxu0 0.0
        %326 = vmatpush1.xpose.msra.mxu0 0.0
        %327 = vmatprep.subr.mxu0 0.0
        %328 = vmatpush1.xpose.msra.mxu0 0.0
        %329 = vmatprep.subr.mxu0 0.0
        %330 = vmatpush1.xpose.msra.mxu0 0.0
        %331 = vmatprep.subr.mxu0 0.0
        %332 = vmatpush1.xpose.msra.mxu0 0.0
        %333 = vmatprep.subr.mxu0 0.0
        %334 = vmatpush1.xpose.msra.mxu0 0.0
        %335 = vmatprep.subr.mxu0 0.0
        %336 = vmatpush1.xpose.msra.mxu0 0.0
        %337 = vmatprep.subr.mxu0 0.0
        %338 = vmatpush1.xpose.msra.mxu0 %v305
        %339 = vmatprep.subr.mxu0 0.0
        %340 = vmatpush2.xpose.msra.mxu0 0.0
        %341 = vmatprep.subr.mxu0 0.0
        %342 = vmatpush2.xpose.msra.mxu0 0.0
        %343 = vmatprep.subr.mxu0 0.0
        %344 = vmatpush2.xpose.msra.mxu0 0.0
        %345 = vmatprep.subr.mxu0 0.0
        %346 = vmatpush2.xpose.msra.mxu0 0.0
        %347 = vmatprep.subr.mxu0 0.0
        %348 = vmatpush2.xpose.msra.mxu0 0.0
        %349 = vmatprep.subr.mxu0 0.0
        %350 = vmatpush2.xpose.msra.mxu0 0.0
        %351 = vmatprep.subr.mxu0 0.0
        %352 = vmatpush2.xpose.msra.mxu0 0.0
        %353 = vmatprep.subr.mxu0 0.0
        %354 = vmatpush2.xpose.msra.mxu0 0.0
        %355 = vmatprep.subr.mxu0 0.0
        %356 = vmatpush2.xpose.msra.mxu0 0.0
        %357 = vmatprep.subr.mxu0 0.0
        %358 = vmatpush2.xpose.msra.mxu0 0.0
        %359 = vmatprep.subr.mxu0 0.0
        %360 = vmatpush2.xpose.msra.mxu0 0.0
        %361 = vmatprep.subr.mxu0 0.0
        %362 = vmatpush2.xpose.msra.mxu0 0.0
        %363 = vmatprep.subr.mxu0 0.0
        %364 = vmatpush2.xpose.msra.mxu0 0.0
        %365 = vmatprep.subr.mxu0 0.0
        %366 = vmatpush2.xpose.msra.mxu0 0.0
        %367 = vmatprep.subr.mxu0 0.0
        %368 = vmatpush2.xpose.msra.mxu0 0.0
        %369 = vmatprep.subr.mxu0 0.0
        %370 = vmatpush2.xpose.msra.mxu0 0.0
        %371 = vmatprep.mubr.f32.mxu0 0.0
        %372 = vmatmul.mubr.f32.gmra.mxu0 %v302
        %v373 = vpop.f32.mrf.mxu0
        %v374 = vadd.f32 0.0, %v373
        %v375 = vpop.f32.mrf.mxu0
        %376 = vdwg.mxu0
        %v377 = vmax.f32 %v374, 0.0
        %v378 = vld [vmem:[%s2] sm:$0xff]
        %v379 = vld [vmem:[%s2 + $0x8] sm:$0xff]
        %v380 = vld [vmem:[%s2 + $0x10] sm:$0xff]
        %v381 = vld [vmem:[%s2 + $0x18] sm:$0xff]
        %v382 = vld [vmem:[%s2 + $0x20] sm:$0xff]
        %v383 = vld [vmem:[%s2 + $0x28] sm:$0xff]
        %v384 = vld [vmem:[%s2 + $0x30] sm:$0xff]
        %v385 = vld [vmem:[%s2 + $0x38] sm:$0xff]
        %vm386 = vcmask 31744
        %v388 = vsel %vm386, %v377, 0
        %v391 = vsel %vm386, %v378, 0
        %v394 = vsel %vm386, %v379, 0
        %v397 = vsel %vm386, %v380, 0
        %v400 = vsel %vm386, %v381, 0
        %v403 = vsel %vm386, %v382, 0
        %v406 = vsel %vm386, %v383, 0
        %v409 = vsel %vm386, %v384, 0
        %v412 = vsel %vm386, %v385, 0
        %414 = vmatprep.subr.mxu0 0.0
        %415 = vmatpush1.xpose.msra.mxu0 0.0
        %416 = vmatprep.subr.mxu0 0.0
        %417 = vmatpush1.xpose.msra.mxu0 0.0
        %418 = vmatprep.subr.mxu0 0.0
        %419 = vmatpush1.xpose.msra.mxu0 0.0
        %420 = vmatprep.subr.mxu0 0.0
        %421 = vmatpush1.xpose.msra.mxu0 0.0
        %422 = vmatprep.subr.mxu0 0.0
        %423 = vmatpush1.xpose.msra.mxu0 0.0
        %424 = vmatprep.subr.mxu0 0.0
        %425 = vmatpush1.xpose.msra.mxu0 0.0
        %426 = vmatprep.subr.mxu0 0.0
        %427 = vmatpush1.xpose.msra.mxu0 0.0
        %428 = vmatprep.subr.mxu0 0.0
        %429 = vmatpush1.xpose.msra.mxu0 0.0
        %430 = vmatprep.subr.mxu0 0.0
        %431 = vmatpush1.xpose.msra.mxu0 %v412
        %432 = vmatprep.subr.mxu0 0.0
        %433 = vmatpush1.xpose.msra.mxu0 %v409
        %434 = vmatprep.subr.mxu0 0.0
        %435 = vmatpush1.xpose.msra.mxu0 %v406
        %436 = vmatprep.subr.mxu0 0.0
        %437 = vmatpush1.xpose.msra.mxu0 %v403
        %438 = vmatprep.subr.mxu0 0.0
        %439 = vmatpush1.xpose.msra.mxu0 %v400
        %440 = vmatprep.subr.mxu0 0.0
        %441 = vmatpush1.xpose.msra.mxu0 %v397
        %442 = vmatprep.subr.mxu0 0.0
        %443 = vmatpush1.xpose.msra.mxu0 %v394
        %444 = vmatprep.subr.mxu0 0.0
        %445 = vmatpush1.xpose.msra.mxu0 %v391
        %446 = vmatprep.subr.mxu0 0.0
        %447 = vmatpush2.xpose.msra.mxu0 0.0
        %448 = vmatprep.subr.mxu0 0.0
        %449 = vmatpush2.xpose.msra.mxu0 0.0
        %450 = vmatprep.subr.mxu0 0.0
        %451 = vmatpush2.xpose.msra.mxu0 0.0
        %452 = vmatprep.subr.mxu0 0.0
        %453 = vmatpush2.xpose.msra.mxu0 0.0
        %454 = vmatprep.subr.mxu0 0.0
        %455 = vmatpush2.xpose.msra.mxu0 0.0
        %456 = vmatprep.subr.mxu0 0.0
        %457 = vmatpush2.xpose.msra.mxu0 0.0
        %458 = vmatprep.subr.mxu0 0.0
        %459 = vmatpush2.xpose.msra.mxu0 0.0
        %460 = vmatprep.subr.mxu0 0.0
        %461 = vmatpush2.xpose.msra.mxu0 0.0
        %462 = vmatprep.subr.mxu0 0.0
        %463 = vmatpush2.xpose.msra.mxu0 0.0
        %464 = vmatprep.subr.mxu0 0.0
        %465 = vmatpush2.xpose.msra.mxu0 0.0
        %466 = vmatprep.subr.mxu0 0.0
        %467 = vmatpush2.xpose.msra.mxu0 0.0
        %468 = vmatprep.subr.mxu0 0.0
        %469 = vmatpush2.xpose.msra.mxu0 0.0
        %470 = vmatprep.subr.mxu0 0.0
        %471 = vmatpush2.xpose.msra.mxu0 0.0
        %472 = vmatprep.subr.mxu0 0.0
        %473 = vmatpush2.xpose.msra.mxu0 0.0
        %474 = vmatprep.subr.mxu0 0.0
        %475 = vmatpush2.xpose.msra.mxu0 0.0
        %476 = vmatprep.subr.mxu0 0.0
        %477 = vmatpush2.xpose.msra.mxu0 0.0
        %478 = vmatprep.mubr.f32.mxu0 0.0
        %479 = vmatmul.mubr.f32.gmra.mxu0 %v388
        %v480 = vpop.f32.mrf.mxu0
        %v481 = vadd.f32 0.0, %v480
        %v482 = vpop.f32.mrf.mxu0
        %483 = vdwg.mxu0
        %v484 = vxor.u32 %v481, 2147483648
        %v485 = vmul.f32 %v484, 1.442695
        %v486 = vpow.pop %v485
        %v487 = vadd.f32 %v486, 1.0
        %v488 = vrcp.pop %v487
        %v489 = vmul.f32 1.0, %v488
        %v490 = vlaneseq
        %v491 = vshrl.u32 %v490, 7
        %v492 = vsub.s32 0, %v491
        %v493 = vrot.slane %v489, %v492
        %495 = vbcast.lane.b32.xlu0 %v493, 256
        %v496 = vpop.permute.xlu0 %495
        %s498 = sor.u32 256, 8
        %499 = vbcast.lane.b32.xlu0 %v493, %s498
        %v500 = vpop.permute.xlu0 %499
        %s502 = sor.u32 256, 16
        %503 = vbcast.lane.b32.xlu0 %v493, %s502
        %v504 = vpop.permute.xlu0 %503
        %s506 = sor.u32 256, 24
        %507 = vbcast.lane.b32.xlu0 %v493, %s506
        %v508 = vpop.permute.xlu0 %507
        %s510 = sor.u32 256, 32
        %511 = vbcast.lane.b32.xlu0 %v493, %s510
        %v512 = vpop.permute.xlu0 %511
        %s514 = sor.u32 256, 40
        %515 = vbcast.lane.b32.xlu0 %v493, %s514
        %v516 = vpop.permute.xlu0 %515
        %s518 = sor.u32 256, 48
        %519 = vbcast.lane.b32.xlu0 %v493, %s518
        %v520 = vpop.permute.xlu0 %519
        %s522 = sor.u32 256, 56
        %523 = vbcast.lane.b32.xlu0 %v493, %s522
        %v524 = vpop.permute.xlu0 %523
        %v525 = vmul.f32 %v189, %v496
        %v526 = vmul.f32 %v190, %v496
        %v527 = vmul.f32 %v191, %v500
        %v528 = vmul.f32 %v192, %v500
        %v529 = vmul.f32 %v193, %v504
        %v530 = vmul.f32 %v194, %v504
        %v531 = vmul.f32 %v195, %v508
        %v532 = vmul.f32 %v196, %v508
        %v533 = vmul.f32 %v197, %v512
        %v534 = vmul.f32 %v198, %v512
        %v535 = vmul.f32 %v199, %v516
        %v536 = vmul.f32 %v200, %v516
        %v537 = vmul.f32 %v201, %v520
        %v538 = vmul.f32 %v202, %v520
        %v539 = vmul.f32 %v203, %v524
        %v540 = vmul.f32 %v204, %v524
        %541 = vst [vmem:[%s188] sm:$0xff] %v525
        %542 = vst [vmem:[%s188 + $0x8] sm:$0xff] %v526
        %543 = vst [vmem:[%s188 + $0x10] sm:$0xff] %v527
        %544 = vst [vmem:[%s188 + $0x18] sm:$0xff] %v528
        %545 = vst [vmem:[%s188 + $0x20] sm:$0xff] %v529
        %546 = vst [vmem:[%s188 + $0x28] sm:$0xff] %v530
        %547 = vst [vmem:[%s188 + $0x30] sm:$0xff] %v531
        %548 = vst [vmem:[%s188 + $0x38] sm:$0xff] %v532
        %549 = vst [vmem:[%s188 + $0x40] sm:$0xff] %v533
        %550 = vst [vmem:[%s188 + $0x48] sm:$0xff] %v534
        %551 = vst [vmem:[%s188 + $0x50] sm:$0xff] %v535
        %552 = vst [vmem:[%s188 + $0x58] sm:$0xff] %v536
        %553 = vst [vmem:[%s188 + $0x60] sm:$0xff] %v537
        %554 = vst [vmem:[%s188 + $0x68] sm:$0xff] %v538
        %555 = vst [vmem:[%s188 + $0x70] sm:$0xff] %v539
        %556 = vst [vmem:[%s188 + $0x78] sm:$0xff] %v540
        %s557 = sand.u32 %s96, 1
        %s558 = scalar_lea.sflag [#allocation4], %s557
        %s559 = sand.u32 %s96, 1
        %s560 = smul.addr %s559, 128
        %s561 = scalar_lea.vmem [#allocation5], %s560
        // Predicated region
        $region37: #{tpu_custom_call.1} parent=31 // pred_check
          %p562 = pneg %p106
        $region38: #{tpu_custom_call.1} parent=31 // pred_check_branch
          %564 = sbr.rel (%p562) target = $region40
        $region39: #{tpu_custom_call.1} parent=31 // pred_region
          %s566 = ssub.s32 2048, 2048
          %567 = vsyncadd %s558, %s566
          %s568 = smul.addr %s20, 16
          %s569 = smul.addr %s568, 128
          %s570 = scalar_lea.hbm %s3, %s569
          %s571 = sshll.u32 %s561, 4
          %s572 = int_to_ptr.vmem [resolvable:$true] %s571
          %577 = dma.vmem_to_hbm [thread:$0]  %s572, 2048, %s570, %s558, 256, 256, 16
        $region40: #{tpu_custom_call.1} parent=31 // pred_fallthru
          _
      $region32: #{tpu_custom_call.1} parent=5 // pred_fallthru
        _
      %p578 = scmp.le.s32.totalorder 2, %s15
      // Predicated region
      $region41: #{tpu_custom_call.1} parent=5 // pred_check
        %p579 = pneg %p578
      $region42: #{tpu_custom_call.1} parent=5 // pred_check_branch
        %581 = sbr.rel (%p579) target = $region44
      $region43: #{tpu_custom_call.1} parent=5 // pred_region
        %s582 = ssub.s32 %s15, 2
        // Predicated region
        $region45: #{tpu_custom_call.1} parent=43 // pred_check
          %p583 = pneg %p112
        $region46: #{tpu_custom_call.1} parent=43 // pred_check_branch
          %585 = sbr.rel (%p583) target = $region48
        $region47: #{tpu_custom_call.1} parent=43 // pred_region
          %s586 = sand.u32 %s97, 1
          %s587 = scalar_lea.sflag [#allocation4], %s586
          %s588 = sand.u32 %s97, 1
          %s589 = smul.addr %s588, 128
          %s590 = scalar_lea.vmem [#allocation5], %s589
          %591 = dma.done %s587, 2048
        $region48: #{tpu_custom_call.1} parent=43 // pred_fallthru
          _
      $region44: #{tpu_custom_call.1} parent=5 // pred_fallthru
        _
    $region6: #{tpu_custom_call.1} parent=1 // loop_footer
      %s19 = sadd.s32 1, %s15
    $region7: #{tpu_custom_call.1} parent=1 // loop_footer_branch
      %14 = sbr.rel target = $region3
    $region8: #{tpu_custom_call.1} parent=1 // loop_exit
      _
    %592 = vsyncpa [#allocation3], 1
    %s593 = scalar_lea.sflag [#allocation3], 1
    %594 = vsyncpa %s593, 1
    %595 = vsyncpa [#allocation4], 1
    %s596 = scalar_lea.sflag [#allocation4], 1
    %597 = vsyncpa %s596, 1

</llo_original>
